<compile_context>
chip_gen: v7x
topology: tpu7x:2x2x1
jax: 0.10.0
libtpu: 0.0.40
codegen_flags: <defaults>
</compile_context>

<pallas_src>
import jax
import jax.numpy as jnp
from jax.experimental import pallas as pl
from jax.experimental.pallas import tpu as pltpu


# ----------------------------------------------------------------------------
# Standalone Swish kernel:  out = x + sigmoid(x)   (module's definition)
# ----------------------------------------------------------------------------

def _swish_kernel(x_ref, o_ref):
    x = x_ref[...].astype(jnp.float32)
    # sigmoid(x) = 0.5 * tanh(0.5 * x) + 0.5  -> one EUP transcendental per
    # element; keeps the kernel memory-bound.
    sig = 0.5 * jnp.tanh(0.5 * x) + 0.5
    o_ref[...] = (x + sig).astype(o_ref.dtype)


def _sublanes_for(dtype) -> int:
    # native (sublane, 128) tile second-to-last extent per element width
    return {4: 8, 2: 16, 1: 32}.get(jnp.dtype(dtype).itemsize, 8)


_LANE_CANDIDATES = (4096, 2048, 1024, 512, 256, 128)
_SMALL_BYTES = 1 << 20           # <= 1 MiB -> single full-array block
_TARGET_BLOCK_BYTES = 4 << 20    # ~4 MiB blocks: amortizes the ~0.35us/step
_SWISH_VMEM_LIMIT = 32 << 20     # double-buffered 4 MiB in + 4 MiB out = 16 MiB;
                                 # raise scoped VMEM explicitly so v5e (16 MiB
                                 # default) has headroom; 32 MiB is the v6e/v7x
                                 # default and well under v7x's 64 MiB physical.


def swish(x: jax.Array, *, donate_input: bool = False) -> jax.Array:
    """x + sigmoid(x) via a Pallas TPU kernel. Any shape/dtype."""
    orig_shape = x.shape
    dtype = x.dtype
    itemsize = jnp.dtype(dtype).itemsize
    sub = _sublanes_for(dtype)

    flat = x.reshape(-1)
    n = flat.shape[0]

    # widest lane-dense width that divides n -> no pad/slice round trip
    lanes = 0
    for cand in _LANE_CANDIDATES:
        if n % cand == 0:
            lanes = cand
            break
    padded = False
    if lanes == 0:
        # rare fallback (n not a multiple of 128): minimal pad, costs one
        # extra HBM pass for the pad + slice.
        lanes = 128
        n_pad = pl.cdiv(n, lanes) * lanes
        flat = jnp.pad(flat, (0, n_pad - n))
        padded = True
        n_eff = n_pad
    else:
        n_eff = n

    rows = n_eff // lanes
    x2d = flat.reshape(rows, lanes)
    total_bytes = n_eff * itemsize

    if total_bytes <= _SMALL_BYTES or rows < 4 * sub:
        # one block covering the whole slab (block dims == array dims, so the
        # (8,128) divisibility rule does not apply)
        grid = (1,)
        block = (rows, lanes)
    else:
        # >= 4 balanced blocks (so v7x's two TensorCores both stay busy),
        # each block around _TARGET_BLOCK_BYTES.
        nblk = max(4, pl.cdiv(total_bytes, _TARGET_BLOCK_BYTES))
        rt = pl.cdiv(pl.cdiv(rows, nblk), sub) * sub
        rt = max(sub, min(rt, rows))
        grid = (pl.cdiv(rows, rt),)
        block = (rt, lanes)

    io_aliases = {0: 0} if (donate_input and not padded) else {}

    cost = pl.CostEstimate(
        flops=5 * n_eff,
        transcendentals=n_eff,
        bytes_accessed=2 * n_eff * itemsize,
    )

    out2d = pl.pallas_call(
        _swish_kernel,
        out_shape=jax.ShapeDtypeStruct((rows, lanes), dtype),
        grid_spec=pltpu.PrefetchScalarGridSpec(
            num_scalar_prefetch=0,
            grid=grid,
            in_specs=[pl.BlockSpec(block, lambda i: (i, 0))],
            out_specs=pl.BlockSpec(block, lambda i: (i, 0)),
        ),
        compiler_params=pltpu.CompilerParams(
            dimension_semantics=("parallel",),
            vmem_limit_bytes=_SWISH_VMEM_LIMIT),
        cost_estimate=cost,
        input_output_aliases=io_aliases,
    )(x2d)

    if padded:
        return out2d.reshape(-1)[:n].reshape(orig_shape)
    return out2d.reshape(orig_shape)


# ----------------------------------------------------------------------------
# Fused 1x1 Conv2d + BatchNorm2d (inference) + Swish  (MBConv6 expansion step)
#
# Orientation: out[Cout, M] = W_eff[Cout, C] @ X[C, M] per batch image, where
# M = H*W sits on the lane axis (NCHW -> (N, C, H*W) is a pure reshape, and
# the (N, Cout, H*W) output reshapes straight back to NCHW).  The BN scale is
# folded into W at prep time; shift + Swish run in the epilogue on the f32
# accumulator before the store.
# ----------------------------------------------------------------------------

def _pw_bn_swish_kernel(x_ref, w_ref, shift_ref, o_ref):
    # x_ref: (C, tm)   w_ref: (Cout, C)   shift_ref: (Cout, 1)   o_ref: (Cout, tm)
    acc = jnp.dot(w_ref[...], x_ref[...], preferred_element_type=jnp.float32)
    y = acc + shift_ref[...]
    sig = 0.5 * jnp.tanh(0.5 * y) + 0.5
    o_ref[...] = (y + sig).astype(o_ref.dtype)


def pointwise_conv_bn_swish(x, w, b, gamma, beta, mean, var, *,
                            eps: float = 1e-5,
                            compute_dtype=jnp.bfloat16,
                            lane_block: int = 1024):
    """Fused Conv2d(k=1) + BatchNorm2d (eval mode) + Swish(x)=x+sigmoid(x).

    x: (N, C, H, W)  w: (Cout, C, 1, 1)  b/gamma/beta/mean/var: (Cout,)
    Returns (N, Cout, H, W) in x.dtype.
    """
    N, C, H, W = x.shape
    Cout = w.shape[0]
    M = H * W
    out_dtype = x.dtype
    cdt = jnp.dtype(compute_dtype) if compute_dtype is not None else jnp.dtype(x.dtype)

    # Fold BN scale into the weights (one VPU multiply per output element and
    # one operand DMA saved in the kernel); keep the shift in f32.
    scale = (gamma / jnp.sqrt(var + eps)).astype(jnp.float32)            # (Cout,)
    w_eff = (w.reshape(Cout, C).astype(jnp.float32) * scale[:, None]).astype(cdt)
    shift = ((b - mean) * scale + beta).reshape(Cout, 1).astype(jnp.float32)

    xm = x.reshape(N, C, M).astype(cdt)   # layout-preserving: no HBM transpose

    # Spatial (lane) tile: largest 128-multiple <= lane_block that divides M,
    # else fall back to the full M (block dim == array dim escape hatch for
    # the small deep-layer maps, e.g. 4x4 or 2x2).
    if M % 128 == 0:
        tm = 128
        for cand in (lane_block, 1024, 512, 256, 128):
            if cand <= lane_block and cand % 128 == 0 and M % cand == 0:
                tm = cand
                break
        # keep >= 4 balanced blocks total so both v7x TensorCores get work
        if N * (M // tm) < 4 and (tm // 2) % 128 == 0:
            tm //= 2
    else:
        tm = M
    grid = (N, pl.cdiv(M, tm))

    cost = pl.CostEstimate(
        flops=2 * N * M * C * Cout,
        transcendentals=N * M * Cout,
        bytes_accessed=(N * C * M * cdt.itemsize
                        + Cout * C * cdt.itemsize
                        + Cout * 4
                        + N * Cout * M * jnp.dtype(out_dtype).itemsize),
    )

    out = pl.pallas_call(
        _pw_bn_swish_kernel,
        out_shape=jax.ShapeDtypeStruct((N, Cout, M), out_dtype),
        grid_spec=pltpu.PrefetchScalarGridSpec(
            num_scalar_prefetch=0,
            grid=grid,
            in_specs=[
                # None squeezes the batch dim out of the kernel's view
                pl.BlockSpec((None, C, tm), lambda n, m: (n, 0, m)),   # acts
                pl.BlockSpec((Cout, C), lambda n, m: (0, 0)),          # weights (resident)
                pl.BlockSpec((Cout, 1), lambda n, m: (0, 0)),          # BN shift (resident)
            ],
            out_specs=pl.BlockSpec((None, Cout, tm), lambda n, m: (n, 0, m)),
        ),
        compiler_params=pltpu.CompilerParams(
            dimension_semantics=("parallel", "parallel")),
        cost_estimate=cost,
    )(xm, w_eff, shift)

    return out.reshape(N, Cout, H, W)


# ----------------------------------------------------------------------------
# Tests
# ----------------------------------------------------------------------------

if __name__ == "__main__":
    key = jax.random.PRNGKey(0)
    ks = jax.random.split(key, 9)

    # --- standalone Swish, small path (single full-array block) ------------
    x = jax.random.normal(ks[0], (2, 4, 16, 16), dtype=jnp.float32)
    y = swish(x)
    jax.block_until_ready(y)
    y_ref = x + jax.nn.sigmoid(x)
    assert y.shape == x.shape and y.dtype == x.dtype
    assert float(jnp.max(jnp.abs(y - y_ref))) < 1e-4

    # --- standalone Swish, tiled path (>1 MiB -> 4-block balanced grid) ----
    xl = jax.random.normal(ks[1], (2, 64, 64, 64), dtype=jnp.float32)
    yl = swish(xl)
    jax.block_until_ready(yl)
    yl_ref = xl + jax.nn.sigmoid(xl)
    assert float(jnp.max(jnp.abs(yl - yl_ref))) < 1e-4

    # --- fused 1x1 conv + BN + Swish (MBConv6 expansion, C=4 -> 6C=24) -----
    N, C, H, Wd = 2, 4, 16, 16
    Cout = 6 * C
    xc = jax.random.normal(ks[2], (N, C, H, Wd), jnp.float32)
    xc = xc.astype(jnp.bfloat16).astype(jnp.float32)   # bf16-exact activations
    w = jax.random.normal(ks[3], (Cout, C, 1, 1), jnp.float32)
    b = jax.random.normal(ks[4], (Cout,), jnp.float32) * 0.1
    gamma = 1.0 + 0.1 * jax.random.normal(ks[5], (Cout,), jnp.float32)
    beta = 0.1 * jax.random.normal(ks[6], (Cout,), jnp.float32)
    mean = 0.1 * jax.random.normal(ks[7], (Cout,), jnp.float32)
    var = jnp.abs(jax.random.normal(ks[8], (Cout,), jnp.float32)) + 0.5
    eps = 1e-5

    out = pointwise_conv_bn_swish(xc, w, b, gamma, beta, mean, var, eps=eps)
    jax.block_until_ready(out)

    # plain-JAX reference following the same bf16 operand quantization the
    # kernel uses (MXU accumulates in f32 either way)
    scale_v = gamma / jnp.sqrt(var + eps)
    w_eff_ref = (w.reshape(Cout, C) * scale_v[:, None]).astype(jnp.bfloat16).astype(jnp.float32)
    shift_ref = (b - mean) * scale_v + beta
    xq = xc.astype(jnp.bfloat16).astype(jnp.float32)
    z = jnp.einsum('oc,nchw->nohw', w_eff_ref, xq) + shift_ref[None, :, None, None]
    ref = z + jax.nn.sigmoid(z)
    assert out.shape == ref.shape and out.dtype == ref.dtype
    assert float(jnp.max(jnp.abs(out - ref))) < 1e-3

    print("KERNEL_OK")
</pallas_src>

<mosaic_0001>
module attributes {stable_mosaic.version = 11 : i64} {
  func.func @_swish_kernel(%arg0: i32, %arg1: memref<1x2048xf32, #tpu.memory_space<vmem>>, %arg2: memref<1x2048xf32, #tpu.memory_space<vmem>>) attributes {dimension_semantics = [#tpu.dimension_semantics<parallel>], iteration_bounds = array<i64: 1>, scalar_prefetch = 0 : i64, scratch_operands = 0 : i64, tpu.core_type = #tpu.core_type<tc>, window_params = [{transform_indices = @transform_0, window_bounds = array<i64: 1, 2048>}, {transform_indices = @transform_1, window_bounds = array<i64: 1, 2048>}]} {
    %c0 = arith.constant 0 : index
    %c0_0 = arith.constant 0 : index
    %0 = vector.load %arg1[%c0, %c0_0] : memref<1x2048xf32, #tpu.memory_space<vmem>>, vector<1x2048xf32>
    %cst = arith.constant 5.000000e-01 : f32
    %1 = vector.broadcast %cst : f32 to vector<1x2048xf32>
    %2 = arith.mulf %1, %0 : vector<1x2048xf32>
    %3 = math.tanh %2 : vector<1x2048xf32>
    %cst_1 = arith.constant 5.000000e-01 : f32
    %4 = vector.broadcast %cst_1 : f32 to vector<1x2048xf32>
    %5 = arith.mulf %4, %3 : vector<1x2048xf32>
    %cst_2 = arith.constant 5.000000e-01 : f32
    %6 = vector.broadcast %cst_2 : f32 to vector<1x2048xf32>
    %7 = arith.addf %5, %6 : vector<1x2048xf32>
    %8 = arith.addf %0, %7 : vector<1x2048xf32>
    %c0_3 = arith.constant 0 : index
    %c0_4 = arith.constant 0 : index
    %9 = vector.load %arg2[%c0_3, %c0_4] : memref<1x2048xf32, #tpu.memory_space<vmem>>, vector<1x2048xf32>
    tpu.vector_store %arg2[%c0_3, %c0_4], %8 {strides = array<i32>} : memref<1x2048xf32, #tpu.memory_space<vmem>>, vector<1x2048xf32>,
    return
  }
  func.func @transform_0(%arg0: i32) -> (i32, i32) {
    %c0_i32 = arith.constant 0 : i32
    %c0_i32_0 = arith.constant 0 : i32
    return %arg0, %c0_i32 : i32, i32
  }
  func.func @transform_1(%arg0: i32) -> (i32, i32) {
    %c0_i32 = arith.constant 0 : i32
    %c0_i32_0 = arith.constant 0 : i32
    return %arg0, %c0_i32 : i32, i32
  }
}

</mosaic_0001>

<llo_original>
// kernel: tpu_custom_call.1
$region0: #{tpu_custom_call.1}
  #allocation0 [shape = 'u32[]', space=smem, size = 0x4, offset = 0x4, fixed_abs, tag = 'smem constant byte address 0x4 - core index']
  #allocation1 [shape = 'u32[144,128]{1,0:T(1,128)}', space=vmem, size = 0x12000, scoped, tag = 'internal scratch']
  %s0 = inlined_call_operand.hbm [shape: f32[1,2048], index: 0, kind: input, shape index: {}]
  %s1 = inlined_call_operand.hbm [shape: f32[1,2048], index: 1, kind: output, shape index: {}]
  %s2 = sld [smem:[#allocation0]]
  $region18: #{tpu_custom_call.1} parent=0
    _
  %s4 = ssub.s32 1, %s2
  %s5 = scalar_select 0, %s4, %s2
  $region1: #{tpu_custom_call.1} parent=0
    #allocation2 [shape = 'u8[8192]{0}', space=vmem, size = 0x2000, scoped, tag = 'input window, operand 0, single buffered']
    #allocation3 [shape = 's32[1]{0}', space=sflag, size = 0x4, scoped, tag = 'scoped memory for tpu_custom_call.1']
    #allocation4 [shape = 's32[1]{0}', space=sflag, size = 0x4, scoped, tag = 'scoped memory for tpu_custom_call.1']
    #allocation5 [shape = 'u8[8192]{0}', space=vmem, size = 0x2000, scoped, tag = 'output window, operand 0, single buffered']
    %6 = vsyncpa [#allocation3], 0
    %7 = vsyncpa [#allocation4], 0
    // Predicated region
    $region2: #{tpu_custom_call.1} parent=1 // pred_check
      _
    $region3: #{tpu_custom_call.1} parent=1 // pred_check_branch
      %9 = sbr.rel (0) target = $region5
    $region4: #{tpu_custom_call.1} parent=1 // pred_region
      %s11 = ssub.s32 256, 256
      %12 = vsyncadd [#allocation3], %s11
      %s14 = sshll.u32 [#allocation2], 4
      %s15 = int_to_ptr.vmem [resolvable:$true] %s14
      %17 = dma.hbm_to_vmem [thread:$0]  %s0, 256, %s15, [#allocation3]
    $region5: #{tpu_custom_call.1} parent=1 // pred_fallthru
      _
    // Predicated region
    $region6: #{tpu_custom_call.1} parent=1 // pred_check
      _
    $region7: #{tpu_custom_call.1} parent=1 // pred_check_branch
      %19 = sbr.rel (0) target = $region9
    $region8: #{tpu_custom_call.1} parent=1 // pred_region
      %20 = dma.done [#allocation3], 256
    $region9: #{tpu_custom_call.1} parent=1 // pred_fallthru
      _
    %v21 = vld [vmem:[#allocation2] sm:$0xff]
    %v22 = vld [vmem:[#allocation2 + $0x8] sm:$0xff]
    %v23 = vmul.f32 %v21, 0.5
    %v24 = vmul.f32 %v22, 0.5
    %v25 = vtanh.pop %v23
    %v26 = vtanh.pop %v24
    %v27 = vmul.f32 %v25, 0.5
    %v28 = vmul.f32 %v26, 0.5
    %v29 = vadd.f32 %v27, 0.5
    %v30 = vadd.f32 %v28, 0.5
    %v31 = vadd.f32 %v21, %v29
    %v32 = vadd.f32 %v22, %v30
    %33 = vst [vmem:[#allocation5] sm:$0xff] %v31
    %34 = vst [vmem:[#allocation5 + $0x8] sm:$0xff] %v32
    // Predicated region
    $region10: #{tpu_custom_call.1} parent=1 // pred_check
      _
    $region11: #{tpu_custom_call.1} parent=1 // pred_check_branch
      %36 = sbr.rel (0) target = $region13
    $region12: #{tpu_custom_call.1} parent=1 // pred_region
      %s38 = ssub.s32 256, 256
      %39 = vsyncadd [#allocation4], %s38
      %s41 = sshll.u32 [#allocation5], 4
      %s42 = int_to_ptr.vmem [resolvable:$true] %s41
      %44 = dma.vmem_to_hbm [thread:$0]  %s42, 256, %s1, [#allocation4]
    $region13: #{tpu_custom_call.1} parent=1 // pred_fallthru
      _
    // Predicated region
    $region14: #{tpu_custom_call.1} parent=1 // pred_check
      _
    $region15: #{tpu_custom_call.1} parent=1 // pred_check_branch
      %46 = sbr.rel (0) target = $region17
    $region16: #{tpu_custom_call.1} parent=1 // pred_region
      %47 = dma.done [#allocation4], 256
    $region17: #{tpu_custom_call.1} parent=1 // pred_fallthru
      _
    %48 = vsyncpa [#allocation3], 1
    %49 = vsyncpa [#allocation4], 1

</llo_original>
